<compile_context>
chip_gen: v5e
topology: v5e:2x2
jax: 0.10.0
libtpu: 0.0.40
codegen_flags: <defaults>
</compile_context>

<pallas_src>
import jax
import jax.numpy as jnp
from jax.experimental import pallas as pl
from jax.experimental.pallas import tpu as pltpu


def _round_up(x, m):
    return (x + m - 1) // m * m


def _gcn_kernel(x_ref, w1_ref, beff_ref, w2_ref, b2_ref, o_ref):
    # x_ref:    (C, Lc)  bf16  batch-folded, adjacency-premixed activations
    # w1_ref:   (C, C)   bf16  BN-folded conv1 weight
    # beff_ref: (C, Lc)  f32   effective bias: s*b1*colsum(A) + (beta - s*mean)
    # w2_ref:   (K, C)   bf16  classifier weight
    # b2_ref:   (K, 1)   f32   classifier bias (broadcast over lanes)
    # o_ref:    (K, Lc)  f32   lane-dense output slab
    y = jnp.dot(w1_ref[...], x_ref[...], preferred_element_type=jnp.float32)
    y = jnp.maximum(y + beff_ref[...], 0.0)                    # BN(eval)+bias, ReLU
    out = jnp.dot(w2_ref[...], y.astype(w2_ref.dtype),
                  preferred_element_type=jnp.float32)
    o_ref[...] = out + b2_ref[...]


def gcn_forward(x, params, *, target_lanes=8192):
    B, C, N = x.shape
    K = params["w2"].shape[0]
    adj = params["adj"]

    # ---- fold BN(eval) + conv1 bias into the weights (tiny; fused under jit) ----
    s = params["gamma"][:, 0] * jax.lax.rsqrt(params["var"][:, 0] + 1e-5)      # (C,)
    t = params["beta"][:, 0] - params["mean"][:, 0] * s                        # (C,)
    w1f = (s[:, None] * params["w1"]).astype(jnp.bfloat16)                     # (C, C)
    colsum = jnp.sum(adj, axis=0)                                              # (N,)
    b_batch = (s * params["b1"][:, 0])[:, None] * colsum[None, :] + t[:, None] # (C, N)

    # ---- adjacency mix commutes with the pointwise conv: apply x@A here ----
    xa = jnp.einsum("bcn,nm->bcm", x, adj).astype(jnp.bfloat16)                # (B, C, N)

    # ---- batch chunking: Bc batches per grid step, lane-dense columns ----
    Bc = max(1, min(B, target_lanes // max(N, 1)))
    if B > 1 and -(-B // Bc) < 2:      # prefer >=2 steps so v7x's 2 TCs both work
        Bc = -(-B // 2)
    G = -(-B // Bc)                    # cdiv
    Bp = G * Bc
    Lc = _round_up(Bc * N, 128)        # lane-dense minor dimension per chunk

    # Fold batch into lanes: (B, C, N) -> (C, G*Lc), zero padded.  Under jit the
    # einsum/transpose/pad fuse into the single HBM pass that writes xf.
    xp = jnp.pad(xa, ((0, Bp - B), (0, 0), (0, 0)))             # (Bp, C, N)
    xf = xp.transpose(1, 0, 2).reshape(C, G, Bc * N)            # (C, G, Bc*N)
    xf = jnp.pad(xf, ((0, 0), (0, 0), (0, Lc - Bc * N)))        # (C, G, Lc)
    xf = xf.reshape(C, G * Lc)

    # Effective bias, tiled per batch inside a chunk (same for every chunk).
    beff = jnp.tile(b_batch, (1, Bc))                           # (C, Bc*N)
    beff = jnp.pad(beff, ((0, 0), (0, Lc - Bc * N)))            # (C, Lc) f32

    w2 = params["w2"].astype(jnp.bfloat16)                      # (K, C)
    b2 = params["b2"]                                           # (K, 1) f32

    out_flat = pl.pallas_call(
        _gcn_kernel,
        out_shape=jax.ShapeDtypeStruct((K, G * Lc), jnp.float32),
        grid_spec=pltpu.PrefetchScalarGridSpec(
            num_scalar_prefetch=0,
            grid=(G,),
            in_specs=[
                pl.BlockSpec((C, Lc), lambda g: (0, g)),   # x: streamed per chunk
                pl.BlockSpec((C, C), lambda g: (0, 0)),    # w1 (BN-folded, resident)
                pl.BlockSpec((C, Lc), lambda g: (0, 0)),   # effective bias (resident)
                pl.BlockSpec((K, C), lambda g: (0, 0)),    # w2 (resident)
                pl.BlockSpec((K, 1), lambda g: (0, 0)),    # b2 (resident)
            ],
            out_specs=pl.BlockSpec((K, Lc), lambda g: (0, g)),
        ),
        compiler_params=pltpu.CompilerParams(
            dimension_semantics=("parallel",)),
    )(xf, w1f, beff, w2, b2)

    # ---- un-fold: (K, G*Lc) -> (B, K, N) ----
    out = out_flat.reshape(K, G, Lc)[:, :, :Bc * N]
    out = out.reshape(K, G, Bc, N).transpose(1, 2, 0, 3).reshape(Bp, K, N)
    return out[:B]


def init_params(key, num_joints, in_features, num_classes,
                use_global_token=False):
    k1, k2, k3, k4 = jax.random.split(key, 4)
    C, N, K = in_features, num_joints, num_classes

    adj = jnp.eye(N, dtype=jnp.float32) / 200.0 + 1.0 / 2000.0
    if use_global_token:
        adj = adj.at[0].add(1.0 / 200.0)
        adj = adj.at[:, 0].add(1.0 / 200.0)

    scale1 = 1.0 / jnp.sqrt(jnp.float32(C))
    scale2 = 1.0 / jnp.sqrt(jnp.float32(C))
    return {
        "adj": adj,
        "w1": jax.random.uniform(k1, (C, C), jnp.float32, -scale1, scale1),
        "b1": jax.random.uniform(k2, (C, 1), jnp.float32, -scale1, scale1),
        "gamma": jnp.ones((C, 1), jnp.float32),
        "beta": jnp.zeros((C, 1), jnp.float32),
        "mean": jnp.zeros((C, 1), jnp.float32),
        "var": jnp.ones((C, 1), jnp.float32),
        "w2": jax.random.uniform(k3, (K, C), jnp.float32, -scale2, scale2),
        "b2": jax.random.uniform(k4, (K, 1), jnp.float32, -scale2, scale2),
    }


def gcn_reference(x, p):
    # plain-JAX f32 reference (unfolded BN, matches the PyTorch eval forward)
    y = jnp.einsum("oc,bcn->bon", p["w1"], x) + p["b1"][None]
    y = jnp.einsum("bcn,nm->bcm", y, p["adj"])
    y = (y - p["mean"][None]) * jax.lax.rsqrt(p["var"][None] + 1e-5)
    y = y * p["gamma"][None] + p["beta"][None]
    y = jnp.maximum(y, 0.0)
    return jnp.einsum("kc,bcn->bkn", p["w2"], y) + p["b2"][None]


if __name__ == "__main__":
    B, num_joints, in_features, num_classes = 2, 8, 32, 16
    key = jax.random.PRNGKey(0)
    kx, kp = jax.random.split(key)

    x = jax.random.normal(kx, (B, in_features, num_joints), jnp.float32)
    params = init_params(kp, num_joints, in_features, num_classes)

    fwd = jax.jit(gcn_forward)          # fuse the wrapper fold/pad with the kernel
    out = jax.block_until_ready(fwd(x, params))

    ref = gcn_reference(x, params)
    assert out.shape == (B, num_classes, num_joints)
    # bf16 MXU operands (f32 accumulation/epilogue) -> looser tolerance than
    # the pure-f32 variant.
    assert jnp.allclose(out, ref, atol=2e-3, rtol=2e-2), \
        float(jnp.max(jnp.abs(out - ref)))
    print("KERNEL_OK")
</pallas_src>

<mosaic_0001>
module attributes {stable_mosaic.version = 11 : i64} {
  func.func @_gcn_kernel(%arg0: i32, %arg1: memref<32x128xbf16, #tpu.memory_space<vmem>>, %arg2: memref<32x32xbf16, #tpu.memory_space<vmem>>, %arg3: memref<32x128xf32, #tpu.memory_space<vmem>>, %arg4: memref<16x32xbf16, #tpu.memory_space<vmem>>, %arg5: memref<16x1xf32, #tpu.memory_space<vmem>>, %arg6: memref<16x128xf32, #tpu.memory_space<vmem>>) attributes {dimension_semantics = [#tpu.dimension_semantics<parallel>], iteration_bounds = array<i64: 2>, scalar_prefetch = 0 : i64, scratch_operands = 0 : i64, tpu.core_type = #tpu.core_type<tc>, window_params = [{transform_indices = @transform_0, window_bounds = array<i64: 32, 128>}, {pipeline_mode = #tpu.pipeline_mode<synchronous>, transform_indices = @transform_1, window_bounds = array<i64: 32, 32>}, {pipeline_mode = #tpu.pipeline_mode<synchronous>, transform_indices = @transform_2, window_bounds = array<i64: 32, 128>}, {pipeline_mode = #tpu.pipeline_mode<synchronous>, transform_indices = @transform_3, window_bounds = array<i64: 16, 32>}, {pipeline_mode = #tpu.pipeline_mode<synchronous>, transform_indices = @transform_4, window_bounds = array<i64: 16, 1>}, {transform_indices = @transform_5, window_bounds = array<i64: 16, 128>}]} {
    %c0 = arith.constant 0 : index
    %c0_0 = arith.constant 0 : index
    %0 = vector.load %arg2[%c0, %c0_0] : memref<32x32xbf16, #tpu.memory_space<vmem>>, vector<32x32xbf16>
    %c0_1 = arith.constant 0 : index
    %c0_2 = arith.constant 0 : index
    %1 = vector.load %arg1[%c0_1, %c0_2] : memref<32x128xbf16, #tpu.memory_space<vmem>>, vector<32x128xbf16>
    %cst = arith.constant dense<0.000000e+00> : vector<32x128xf32>
    %2 = tpu.matmul %0, %1, %cst {dimension_numbers = #tpu.dot_dimension_numbers<[1], [0], [0], [1], [0, 0, 1, 1], [], []>} : vector<32x32xbf16>, vector<32x128xbf16>, vector<32x128xf32> -> vector<32x128xf32>
    %c0_3 = arith.constant 0 : index
    %c0_4 = arith.constant 0 : index
    %3 = vector.load %arg3[%c0_3, %c0_4] : memref<32x128xf32, #tpu.memory_space<vmem>>, vector<32x128xf32>
    %4 = arith.addf %2, %3 : vector<32x128xf32>
    %cst_5 = arith.constant 0.000000e+00 : f32
    %5 = vector.broadcast %cst_5 : f32 to vector<32x128xf32>
    %6 = arith.maximumf %4, %5 : vector<32x128xf32>
    %c0_6 = arith.constant 0 : index
    %c0_7 = arith.constant 0 : index
    %7 = vector.load %arg4[%c0_6, %c0_7] : memref<16x32xbf16, #tpu.memory_space<vmem>>, vector<16x32xbf16>
    %8 = arith.truncf %6 : vector<32x128xf32> to vector<32x128xbf16>
    %cst_8 = arith.constant dense<0.000000e+00> : vector<16x128xf32>
    %9 = tpu.matmul %7, %8, %cst_8 {dimension_numbers = #tpu.dot_dimension_numbers<[1], [0], [0], [1], [0, 0, 1, 1], [], []>} : vector<16x32xbf16>, vector<32x128xbf16>, vector<16x128xf32> -> vector<16x128xf32>
    %c0_9 = arith.constant 0 : index
    %c0_10 = arith.constant 0 : index
    %10 = vector.load %arg5[%c0_9, %c0_10] : memref<16x1xf32, #tpu.memory_space<vmem>>, vector<16x1xf32>
    %11 = vector.broadcast %10 : vector<16x1xf32> to vector<16x128xf32>
    %12 = arith.addf %9, %11 : vector<16x128xf32>
    %c0_11 = arith.constant 0 : index
    %c0_12 = arith.constant 0 : index
    %13 = vector.load %arg6[%c0_11, %c0_12] : memref<16x128xf32, #tpu.memory_space<vmem>>, vector<16x128xf32>
    tpu.vector_store %arg6[%c0_11, %c0_12], %12 {strides = array<i32>} : memref<16x128xf32, #tpu.memory_space<vmem>>, vector<16x128xf32>,
    return
  }
  func.func @transform_0(%arg0: i32) -> (i32, i32) {
    %c0_i32 = arith.constant 0 : i32
    %c0_i32_0 = arith.constant 0 : i32
    return %c0_i32, %arg0 : i32, i32
  }
  func.func @transform_1(%arg0: i32) -> (i32, i32) {
    %c0_i32 = arith.constant 0 : i32
    %c0_i32_0 = arith.constant 0 : i32
    %c0_i32_1 = arith.constant 0 : i32
    return %c0_i32, %c0_i32_0 : i32, i32
  }
  func.func @transform_2(%arg0: i32) -> (i32, i32) {
    %c0_i32 = arith.constant 0 : i32
    %c0_i32_0 = arith.constant 0 : i32
    %c0_i32_1 = arith.constant 0 : i32
    return %c0_i32, %c0_i32_0 : i32, i32
  }
  func.func @transform_3(%arg0: i32) -> (i32, i32) {
    %c0_i32 = arith.constant 0 : i32
    %c0_i32_0 = arith.constant 0 : i32
    %c0_i32_1 = arith.constant 0 : i32
    return %c0_i32, %c0_i32_0 : i32, i32
  }
  func.func @transform_4(%arg0: i32) -> (i32, i32) {
    %c0_i32 = arith.constant 0 : i32
    %c0_i32_0 = arith.constant 0 : i32
    %c0_i32_1 = arith.constant 0 : i32
    return %c0_i32, %c0_i32_0 : i32, i32
  }
  func.func @transform_5(%arg0: i32) -> (i32, i32) {
    %c0_i32 = arith.constant 0 : i32
    %c0_i32_0 = arith.constant 0 : i32
    return %c0_i32, %arg0 : i32, i32
  }
}

</mosaic_0001>

<llo_original>
// kernel: gcn_forward.1
$region0: #{gcn_forward.1}
  #allocation0 [shape = 'u32[]', space=smem, size = 0x4, offset = 0x4, fixed_abs, tag = 'smem constant byte address 0x4 - core index']
  #allocation1 [shape = 'u32[72,128]{1,0:T(1,128)}', space=vmem, size = 0x9000, scoped, tag = 'internal scratch']
  %s0 = inlined_call_operand.vmem [shape: bf16[32,256], index: 0, kind: input, shape index: {}]
  %s1 = inlined_call_operand.vmem [shape: bf16[32,32], index: 1, kind: input, shape index: {}]
  %s2 = inlined_call_operand.vmem [shape: f32[32,128], index: 2, kind: input, shape index: {}]
  %s3 = inlined_call_operand.vmem [shape: bf16[16,32], index: 3, kind: input, shape index: {}]
  %s4 = inlined_call_operand.vmem [shape: f32[16,1], index: 4, kind: input, shape index: {}]
  %s5 = inlined_call_operand.vmem [shape: f32[16,256], index: 5, kind: output, shape index: {}]
  %s6 = sld [smem:[#allocation0]]
  $region128: #{gcn_forward.1} parent=0
    _
  %s8 = ssub.s32 1, %s6
  %s9 = scalar_select 0, %s8, %s6
  $region1: #{gcn_forward.1} parent=0
    #allocation2 [shape = 'u8[16384]{0}', space=vmem, size = 0x4000, scoped, tag = 'input window, operand 0']
    #allocation3 [shape = 'u8[16384]{0}', space=vmem, size = 0x4000, scoped, tag = 'output window, operand 0']
    loop: start=0, step=1, limit=4
    $region2: #{gcn_forward.1} parent=1 // loop_pre_header
      _
    $region3: #{gcn_forward.1} parent=1 // loop_header
      %s11 = sphi 0, %s15
      %p12 = scmp.ge.s32.totalorder %s11, 4
      %s21 = sphi 0, %s23
      %s24 = sphi 0, %s21
      %s25 = sphi 0, %s24
      %s41 = sphi 0, %s25
      %s45 = sphi 0, %s45
      %s47 = sphi 0, %s45
      %s48 = sphi 0, %s47
      %s62 = sphi 0, %s48
      %s66 = sphi 0, %s66
      %s68 = sphi 0, %s66
      %s69 = sphi 0, %s68
      %s83 = sphi 0, %s69
      %s87 = sphi 0, %s87
      %s89 = sphi 0, %s87
      %s90 = sphi 0, %s89
      %s104 = sphi 0, %s90
      %s108 = sphi 0, %s108
      %s110 = sphi 0, %s108
      %s111 = sphi 0, %s110
      %s125 = sphi 0, %s111
      %s131 = sphi 0, %s133
      %s134 = sphi 0, %s131
      %s135 = sphi 0, %s134
      %s151 = sphi 0, %s135
    $region4: #{gcn_forward.1} parent=1 // loop_header_branch
      %14 = sbr.rel (%p12) target = $region8
    $region5: #{gcn_forward.1} parent=1 // loop_body
      %s16 = ssub.s32 %s11, 1
      %s17 = ssub.s32 %s11, 2
      %s18 = sadd.s32 %s11, 1
      %s19 = ssub.s32 %s11, %s18
      %p20 = scmp.eq.s32.totalorder %s19, 0
      %s22 = sadd.s32 %s21, 1
      %s23 = scalar_select %p20, %s21, %s22
      %p26 = pneg %p20
      %p27 = scmp.eq.s32.totalorder %s11, 1
      %p28 = por %p26, %p27
      %p29 = scmp.ne.s32.totalorder %s21, %s24
      %p30 = scmp.eq.s32.totalorder %s11, 0
      %p31 = por %p29, %p30
      %p32 = scmp.ne.s32.totalorder %s21, %s24
      %p33 = scmp.eq.s32.totalorder %s16, 1
      %p34 = por %p32, %p33
      %p35 = scmp.ne.s32.totalorder %s24, %s25
      %p36 = scmp.eq.s32.totalorder %s16, 0
      %p37 = por %p35, %p36
      %p38 = scmp.ne.s32.totalorder %s24, %s25
      %p39 = scmp.eq.s32.totalorder %s17, 1
      %p40 = por %p38, %p39
      %p42 = scmp.ne.s32.totalorder %s25, %s41
      %p43 = scmp.eq.s32.totalorder %s17, 0
      %p44 = por %p42, %p43
      %s46 = sadd.s32 %s45, 1
      %p49 = scmp.eq.s32.totalorder %s11, 1
      %p50 = scmp.ne.s32.totalorder %s45, %s47
      %p51 = scmp.eq.s32.totalorder %s11, 0
      %p52 = por %p50, %p51
      %p53 = scmp.ne.s32.totalorder %s45, %s47
      %p54 = scmp.eq.s32.totalorder %s16, 1
      %p55 = por %p53, %p54
      %p56 = scmp.ne.s32.totalorder %s47, %s48
      %p57 = scmp.eq.s32.totalorder %s16, 0
      %p58 = por %p56, %p57
      %p59 = scmp.ne.s32.totalorder %s47, %s48
      %p60 = scmp.eq.s32.totalorder %s17, 1
      %p61 = por %p59, %p60
      %p63 = scmp.ne.s32.totalorder %s48, %s62
      %p64 = scmp.eq.s32.totalorder %s17, 0
      %p65 = por %p63, %p64
      %s67 = sadd.s32 %s66, 1
      %p70 = scmp.eq.s32.totalorder %s11, 1
      %p71 = scmp.ne.s32.totalorder %s66, %s68
      %p72 = scmp.eq.s32.totalorder %s11, 0
      %p73 = por %p71, %p72
      %p74 = scmp.ne.s32.totalorder %s66, %s68
      %p75 = scmp.eq.s32.totalorder %s16, 1
      %p76 = por %p74, %p75
      %p77 = scmp.ne.s32.totalorder %s68, %s69
      %p78 = scmp.eq.s32.totalorder %s16, 0
      %p79 = por %p77, %p78
      %p80 = scmp.ne.s32.totalorder %s68, %s69
      %p81 = scmp.eq.s32.totalorder %s17, 1
      %p82 = por %p80, %p81
      %p84 = scmp.ne.s32.totalorder %s69, %s83
      %p85 = scmp.eq.s32.totalorder %s17, 0
      %p86 = por %p84, %p85
      %s88 = sadd.s32 %s87, 1
      %p91 = scmp.eq.s32.totalorder %s11, 1
      %p92 = scmp.ne.s32.totalorder %s87, %s89
      %p93 = scmp.eq.s32.totalorder %s11, 0
      %p94 = por %p92, %p93
      %p95 = scmp.ne.s32.totalorder %s87, %s89
      %p96 = scmp.eq.s32.totalorder %s16, 1
      %p97 = por %p95, %p96
      %p98 = scmp.ne.s32.totalorder %s89, %s90
      %p99 = scmp.eq.s32.totalorder %s16, 0
      %p100 = por %p98, %p99
      %p101 = scmp.ne.s32.totalorder %s89, %s90
      %p102 = scmp.eq.s32.totalorder %s17, 1
      %p103 = por %p101, %p102
      %p105 = scmp.ne.s32.totalorder %s90, %s104
      %p106 = scmp.eq.s32.totalorder %s17, 0
      %p107 = por %p105, %p106
      %s109 = sadd.s32 %s108, 1
      %p112 = scmp.eq.s32.totalorder %s11, 1
      %p113 = scmp.ne.s32.totalorder %s108, %s110
      %p114 = scmp.eq.s32.totalorder %s11, 0
      %p115 = por %p113, %p114
      %p116 = scmp.ne.s32.totalorder %s108, %s110
      %p117 = scmp.eq.s32.totalorder %s16, 1
      %p118 = por %p116, %p117
      %p119 = scmp.ne.s32.totalorder %s110, %s111
      %p120 = scmp.eq.s32.totalorder %s16, 0
      %p121 = por %p119, %p120
      %p122 = scmp.ne.s32.totalorder %s110, %s111
      %p123 = scmp.eq.s32.totalorder %s17, 1
      %p124 = por %p122, %p123
      %p126 = scmp.ne.s32.totalorder %s111, %s125
      %p127 = scmp.eq.s32.totalorder %s17, 0
      %p128 = por %p126, %p127
      %s129 = ssub.s32 %s11, %s18
      %p130 = scmp.eq.s32.totalorder %s129, 0
      %s132 = sadd.s32 %s131, 1
      %s133 = scalar_select %p130, %s131, %s132
      %p136 = pneg %p130
      %p137 = scmp.eq.s32.totalorder %s11, 1
      %p138 = por %p136, %p137
      %p139 = scmp.ne.s32.totalorder %s131, %s134
      %p140 = scmp.eq.s32.totalorder %s11, 0
      %p141 = por %p139, %p140
      %p142 = scmp.ne.s32.totalorder %s131, %s134
      %p143 = scmp.eq.s32.totalorder %s16, 1
      %p144 = por %p142, %p143
      %p145 = scmp.ne.s32.totalorder %s134, %s135
      %p146 = scmp.eq.s32.totalorder %s16, 0
      %p147 = por %p145, %p146
      %p148 = scmp.ne.s32.totalorder %s134, %s135
      %p149 = scmp.eq.s32.totalorder %s17, 1
      %p150 = por %p148, %p149
      %p152 = scmp.ne.s32.totalorder %s135, %s151
      %p153 = scmp.eq.s32.totalorder %s17, 0
      %p154 = por %p152, %p153
      %p155 = scmp.le.s32.totalorder 1, %s11
      %p156 = scmp.lt.s32.totalorder %s11, 3
      %p157 = pnand %p155, %p156
      %p158 = pneg %p157
      // Predicated region
      $region9: #{gcn_forward.1} parent=5 // pred_check
        _
      $region10: #{gcn_forward.1} parent=5 // pred_check_branch
        %160 = sbr.rel (%p157) target = $region12
      $region11: #{gcn_forward.1} parent=5 // pred_region
        %s161 = ssub.s32 %s11, 1
        // Predicated region
        $region13: #{gcn_forward.1} parent=11 // pred_check
          %p162 = pneg %p58
        $region14: #{gcn_forward.1} parent=11 // pred_check_branch
          %164 = sbr.rel (%p162) target = $region16
        $region15: #{gcn_forward.1} parent=11 // pred_region
          _
        $region16: #{gcn_forward.1} parent=11 // pred_fallthru
          _
        // Predicated region
        $region17: #{gcn_forward.1} parent=11 // pred_check
          %p165 = pneg %p79
        $region18: #{gcn_forward.1} parent=11 // pred_check_branch
          %167 = sbr.rel (%p165) target = $region20
        $region19: #{gcn_forward.1} parent=11 // pred_region
          _
        $region20: #{gcn_forward.1} parent=11 // pred_fallthru
          _
        // Predicated region
        $region21: #{gcn_forward.1} parent=11 // pred_check
          %p168 = pneg %p100
        $region22: #{gcn_forward.1} parent=11 // pred_check_branch
          %170 = sbr.rel (%p168) target = $region24
        $region23: #{gcn_forward.1} parent=11 // pred_region
          _
        $region24: #{gcn_forward.1} parent=11 // pred_fallthru
          _
        // Predicated region
        $region25: #{gcn_forward.1} parent=11 // pred_check
          %p171 = pneg %p121
        $region26: #{gcn_forward.1} parent=11 // pred_check_branch
          %173 = sbr.rel (%p171) target = $region28
        $region27: #{gcn_forward.1} parent=11 // pred_region
          _
        $region28: #{gcn_forward.1} parent=11 // pred_fallthru
          _
      $region12: #{gcn_forward.1} parent=5 // pred_fallthru
        _
      %p174 = scmp.lt.s32.totalorder %s11, 2
      // Predicated region
      $region29: #{gcn_forward.1} parent=5 // pred_check
        %p175 = pneg %p174
      $region30: #{gcn_forward.1} parent=5 // pred_check_branch
        %177 = sbr.rel (%p175) target = $region32
      $region31: #{gcn_forward.1} parent=5 // pred_region
        // Predicated region
        $region33: #{gcn_forward.1} parent=31 // pred_check
          %p178 = pneg %p31
        $region34: #{gcn_forward.1} parent=31 // pred_check_branch
          %180 = sbr.rel (%p178) target = $region36
        $region35: #{gcn_forward.1} parent=31 // pred_region
          %s181 = sand.u32 %s21, 1
          %s182 = sand.u32 %s21, 1
          %s183 = smul.addr %s182, 16
          %s184 = scalar_lea.vmem [#allocation2], %s183
          %s185 = smul.addr %s11, 4
          %s186 = scalar_lea.vmem %s0, %s185
          // Predicated region
          $region37: #{gcn_forward.1} parent=35 // pred_check
            _
          $region38: #{gcn_forward.1} parent=35 // pred_check_branch
            %188 = sbr.rel (0) target = $region40
          $region39: #{gcn_forward.1} parent=35 // pred_region
            // Predicated region
            $region41: #{gcn_forward.1} parent=39 // pred_check
              _
            $region42: #{gcn_forward.1} parent=39 // pred_check_branch
              %190 = sbr.rel target = $region44
            $region43: #{gcn_forward.1} parent=39 // pred_region
              // Predicated region
              $region56: #{gcn_forward.1} parent=43 // pred_check
                _
              $region57: #{gcn_forward.1} parent=43 // pred_check_branch
                %212 = sbr.rel (0) target = $region59
              $region58: #{gcn_forward.1} parent=43 // pred_region
                loop: start=0, step=1, limit=1
                $region60: #{gcn_forward.1} parent=58 // loop_pre_header
                  _
                $region61: #{gcn_forward.1} parent=58 // loop_header
                  %s214 = sphi 0, %s218
                  %p215 = scmp.ge.s32.totalorder %s214, 1
                  %s219 = sphi %s186, %s186
                  %s220 = sphi %s184, %s184
                $region62: #{gcn_forward.1} parent=58 // loop_header_branch
                  %217 = sbr.rel (%p215) target = $region66
                $region63: #{gcn_forward.1} parent=58 // loop_body
                  _
                $region64: #{gcn_forward.1} parent=58 // loop_footer
                  %s218 = sadd.s32 1, %s214
                $region65: #{gcn_forward.1} parent=58 // loop_footer_branch
                  %213 = sbr.rel target = $region61
                $region66: #{gcn_forward.1} parent=58 // loop_exit
                  _
                %s222 = ssub.s32 16, 1
                loop: start=0, step=1, limit=1
                $region67: #{gcn_forward.1} parent=58 // loop_pre_header
                  _
                $region68: #{gcn_forward.1} parent=58 // loop_header
                  %s224 = sphi 0, %s228
                  %p225 = scmp.ge.s32.totalorder %s224, 1
                  %s229 = sphi %s186, %s186
                  %s230 = sphi %s184, %s184
                $region69: #{gcn_forward.1} parent=58 // loop_header_branch
                  %227 = sbr.rel (%p225) target = $region73
                $region70: #{gcn_forward.1} parent=58 // loop_body
                  %v231 = vld [vmem:[%s229] sm:%s222]
                  %232 = vst [vmem:[%s230] sm:%s222] %v231
                  %v233 = vld [vmem:[%s229 + $0x8] sm:%s222]
                  %234 = vst [vmem:[%s230 + $0x4] sm:%s222] %v233
                  %v235 = vld [vmem:[%s229 + $0x10] sm:%s222]
                  %236 = vst [vmem:[%s230 + $0x8] sm:%s222] %v235
                  %v237 = vld [vmem:[%s229 + $0x18] sm:%s222]
                  %238 = vst [vmem:[%s230 + $0xc] sm:%s222] %v237
                $region71: #{gcn_forward.1} parent=58 // loop_footer
                  %s228 = sadd.s32 1, %s224
                $region72: #{gcn_forward.1} parent=58 // loop_footer_branch
                  %223 = sbr.rel target = $region68
                $region73: #{gcn_forward.1} parent=58 // loop_exit
                  _
              $region59: #{gcn_forward.1} parent=43 // pred_fallthru
                _
            $region44: #{gcn_forward.1} parent=39 // pred_fallthru
              _
            // Predicated region
            $region45: #{gcn_forward.1} parent=39 // pred_check
              _
            $region46: #{gcn_forward.1} parent=39 // pred_check_branch
              %192 = sbr.rel (0) target = $region48
            $region47: #{gcn_forward.1} parent=39 // pred_region
              %s194 = ssub.s32 16, 1
              loop: start=0, step=1, limit=1
              $region49: #{gcn_forward.1} parent=47 // loop_pre_header
                _
              $region50: #{gcn_forward.1} parent=47 // loop_header
                %s196 = sphi 0, %s200
                %p197 = scmp.ge.s32.totalorder %s196, 1
                %s201 = sphi %s186, %s186
                %s202 = sphi %s184, %s184
              $region51: #{gcn_forward.1} parent=47 // loop_header_branch
                %199 = sbr.rel (%p197) target = $region55
              $region52: #{gcn_forward.1} parent=47 // loop_body
                %v203 = vld [vmem:[%s201] sm:%s194]
                %204 = vst [vmem:[%s202] sm:%s194] %v203
                %v205 = vld [vmem:[%s201 + $0x8] sm:%s194]
                %206 = vst [vmem:[%s202 + $0x4] sm:%s194] %v205
                %v207 = vld [vmem:[%s201 + $0x10] sm:%s194]
                %208 = vst [vmem:[%s202 + $0x8] sm:%s194] %v207
                %v209 = vld [vmem:[%s201 + $0x18] sm:%s194]
                %210 = vst [vmem:[%s202 + $0xc] sm:%s194] %v209
              $region53: #{gcn_forward.1} parent=47 // loop_footer
                %s200 = sadd.s32 1, %s196
              $region54: #{gcn_forward.1} parent=47 // loop_footer_branch
                %195 = sbr.rel target = $region50
              $region55: #{gcn_forward.1} parent=47 // loop_exit
                _
            $region48: #{gcn_forward.1} parent=39 // pred_fallthru
              _
          $region40: #{gcn_forward.1} parent=35 // pred_fallthru
            _
          %239 = vnop
        $region36: #{gcn_forward.1} parent=31 // pred_fallthru
          _
      $region32: #{gcn_forward.1} parent=5 // pred_fallthru
        _
      %p240 = scmp.le.s32.totalorder 1, %s11
      %p241 = scmp.lt.s32.totalorder %s11, 3
      %p242 = pnand %p240, %p241
      %p243 = pneg %p242
      // Predicated region
      $region74: #{gcn_forward.1} parent=5 // pred_check
        _
      $region75: #{gcn_forward.1} parent=5 // pred_check_branch
        %245 = sbr.rel (%p242) target = $region77
      $region76: #{gcn_forward.1} parent=5 // pred_region
        %s246 = ssub.s32 %s11, 1
        %s247 = sand.u32 %s24, 1
        %s248 = sand.u32 %s24, 1
        %s249 = smul.addr %s248, 16
        %s250 = scalar_lea.vmem [#allocation2], %s249
        // Predicated region
        $region78: #{gcn_forward.1} parent=76 // pred_check
          %p251 = pneg %p37
        $region79: #{gcn_forward.1} parent=76 // pred_check_branch
          %253 = sbr.rel (%p251) target = $region81
        $region80: #{gcn_forward.1} parent=76 // pred_region
          _
        $region81: #{gcn_forward.1} parent=76 // pred_fallthru
          _
        %s254 = sand.u32 %s24, 1
        %s255 = sand.u32 %s24, 1
        %s256 = smul.addr %s255, 16
        %s257 = scalar_lea.vmem [#allocation2], %s256
        %p258 = pneg %p37
        %p259 = pneg %p34
        %p260 = pneg %p58
        %p261 = pneg %p55
        %p262 = pneg %p79
        %p263 = pneg %p76
        %p264 = pneg %p100
        %p265 = pneg %p97
        %p266 = pneg %p121
        %p267 = pneg %p118
        %p268 = pneg %p147
        %p269 = pneg %p144
        %s270 = sand.u32 %s134, 1
        %s271 = sand.u32 %s134, 1
        %s272 = smul.addr %s271, 16
        %s273 = scalar_lea.vmem [#allocation3], %s272
        %v275 = vld [vmem:[%s1] sm:$0xf]
        %v276 = vld [vmem:[%s1 + $0x4] sm:$0xf]
        %v277 = vld [vmem:[%s1 + $0x8] sm:$0xf]
        %v278 = vld [vmem:[%s1 + $0xc] sm:$0xf]
        %v279 = vld [vmem:[%s250] sm:$0xf]
        %v280 = vld [vmem:[%s250 + $0x4] sm:$0xf]
        %v281 = vld [vmem:[%s250 + $0x8] sm:$0xf]
        %v282 = vld [vmem:[%s250 + $0xc] sm:$0xf]
        %v283 = vld [vmem:[%s2] sm:$0xff]
        %v284 = vld [vmem:[%s2 + $0x8] sm:$0xff]
        %v285 = vld [vmem:[%s2 + $0x10] sm:$0xff]
        %v286 = vld [vmem:[%s2 + $0x18] sm:$0xff]
        %v291 = vunpack.c.l.b16 %v275
        %v292 = vunpack.c.l.b16 %v276
        %v293 = vunpack.c.l.b16 %v277
        %v294 = vunpack.c.l.b16 %v278
        %v295 = vpack.c.b16 %v292, %v291
        %v296 = vpack.c.b16 %v294, %v293
        %v301 = vunpack.c.l.b16 %v279
        %v302 = vunpack.c.l.b16 %v280
        %v303 = vunpack.c.l.b16 %v281
        %v304 = vunpack.c.l.b16 %v282
        %v305 = vpack.c.b16 %v302, %v301
        %v306 = vpack.c.b16 %v304, %v303
        %vm309 = vcmask 261120
        %v311 = vsel %vm309, %v295, 0
        %v314 = vsel %vm309, %v296, 0
        %316 = vmatpush.bf16.msra.mxu0 0
        %317 = vmatpush.bf16.msra.mxu0 0
        %318 = vmatpush.bf16.msra.mxu0 0
        %319 = vmatpush.bf16.msra.mxu0 0
        %320 = vmatpush.bf16.msra.mxu0 0
        %321 = vmatpush.bf16.msra.mxu0 0
        %322 = vmatpush.bf16.msra.mxu0 %v306
        %323 = vmatpush.bf16.msra.mxu0 %v305
        %324 = vmatmul.bf16.gmra.mxu0 %v311
        %v325 = vpop.f32.mrf.mxu0
        %v326 = vadd.f32 %v283, %v325
        %v327 = vpop.f32.mrf.mxu0
        %v328 = vadd.f32 %v284, %v327
        %329 = vmatmul.bf16.gmra.mxu0 %v314
        %v330 = vpop.f32.mrf.mxu0
        %v331 = vadd.f32 %v285, %v330
        %v332 = vpop.f32.mrf.mxu0
        %v333 = vadd.f32 %v286, %v332
        %334 = vdwg.mxu0
        %v335 = vmax.f32 %v326, 0.0
        %v336 = vmax.f32 %v328, 0.0
        %v337 = vmax.f32 %v331, 0.0
        %v338 = vmax.f32 %v333, 0.0
        %v339 = vld [vmem:[%s3] sm:$0xf]
        %v340 = vld [vmem:[%s3 + $0x4] sm:$0xf]
        %v341 = vpack.c.bf16 %v336, %v335
        %v342 = vpack.c.bf16 %v338, %v337
        %v343 = vld [vmem:[%s4] sm:$0xff]
        %v344 = vld [vmem:[%s4 + $0x8] sm:$0xff]
        %346 = vset.pattern.permute.xlu0 0
        %347 = vperm.xlu0 %346, %v343
        %v348 = vpop.permute.xlu0 %347
        %351 = vset.pattern.permute.xlu0 0
        %352 = vperm.xlu0 %351, %v344
        %v353 = vpop.permute.xlu0 %352
        %v357 = vunpack.c.l.b16 %v339
        %v358 = vunpack.c.l.b16 %v340
        %v359 = vpack.c.b16 %v358, %v357
        %v361 = vsel %vm309, %v359, 0
        %363 = vmatpush.bf16.msra.mxu0 0
        %364 = vmatpush.bf16.msra.mxu0 0
        %365 = vmatpush.bf16.msra.mxu0 0
        %366 = vmatpush.bf16.msra.mxu0 0
        %367 = vmatpush.bf16.msra.mxu0 0
        %368 = vmatpush.bf16.msra.mxu0 0
        %369 = vmatpush.bf16.msra.mxu0 %v342
        %370 = vmatpush.bf16.msra.mxu0 %v341
        %371 = vmatmul.bf16.gmra.mxu0 %v361
        %v372 = vpop.f32.mrf.mxu0
        %v373 = vadd.f32 %v348, %v372
        %v374 = vpop.f32.mrf.mxu0
        %v375 = vadd.f32 %v353, %v374
        %376 = vdwg.mxu0
        %377 = vst [vmem:[%s273] sm:$0xff] %v373
        %378 = vst [vmem:[%s273 + $0x8] sm:$0xff] %v375
        %s379 = sand.u32 %s134, 1
        %s380 = sand.u32 %s134, 1
        %s381 = smul.addr %s380, 16
        %s382 = scalar_lea.vmem [#allocation3], %s381
        // Predicated region
        $region82: #{gcn_forward.1} parent=76 // pred_check
          %p383 = pneg %p144
        $region83: #{gcn_forward.1} parent=76 // pred_check_branch
          %385 = sbr.rel (%p383) target = $region85
        $region84: #{gcn_forward.1} parent=76 // pred_region
          %s386 = smul.addr %s16, 8
          %s387 = scalar_lea.vmem %s5, %s386
          // Predicated region
          $region86: #{gcn_forward.1} parent=84 // pred_check
            _
          $region87: #{gcn_forward.1} parent=84 // pred_check_branch
            %389 = sbr.rel (0) target = $region89
          $region88: #{gcn_forward.1} parent=84 // pred_region
            // Predicated region
            $region90: #{gcn_forward.1} parent=88 // pred_check
              _
            $region91: #{gcn_forward.1} parent=88 // pred_check_branch
              %391 = sbr.rel (0) target = $region93
            $region92: #{gcn_forward.1} parent=88 // pred_region
              // Predicated region
              $region105: #{gcn_forward.1} parent=92 // pred_check
                _
              $region106: #{gcn_forward.1} parent=92 // pred_check_branch
                %409 = sbr.rel (0) target = $region108
              $region107: #{gcn_forward.1} parent=92 // pred_region
                loop: start=0, step=1, limit=1
                $region109: #{gcn_forward.1} parent=107 // loop_pre_header
                  _
                $region110: #{gcn_forward.1} parent=107 // loop_header
                  %s411 = sphi 0, %s415
                  %p412 = scmp.ge.s32.totalorder %s411, 1
                  %s416 = sphi %s382, %s382
                  %s417 = sphi %s387, %s387
                $region111: #{gcn_forward.1} parent=107 // loop_header_branch
                  %414 = sbr.rel (%p412) target = $region115
                $region112: #{gcn_forward.1} parent=107 // loop_body
                  %v418 = vld [vmem:[%s416] sm:$0xff]
                  %419 = vst [vmem:[%s417] sm:$0xff] %v418
                  %v420 = vld [vmem:[%s416 + $0x8] sm:$0xff]
                  %421 = vst [vmem:[%s417 + $0x10] sm:$0xff] %v420
                $region113: #{gcn_forward.1} parent=107 // loop_footer
                  %s415 = sadd.s32 1, %s411
                $region114: #{gcn_forward.1} parent=107 // loop_footer_branch
                  %410 = sbr.rel target = $region110
                $region115: #{gcn_forward.1} parent=107 // loop_exit
                  _
              $region108: #{gcn_forward.1} parent=92 // pred_fallthru
                _
              // Predicated region
              $region116: #{gcn_forward.1} parent=92 // pred_check
                _
              $region117: #{gcn_forward.1} parent=92 // pred_check_branch
                %423 = sbr.rel target = $region119
              $region118: #{gcn_forward.1} parent=92 // pred_region
                _
              $region119: #{gcn_forward.1} parent=92 // pred_fallthru
                _
            $region93: #{gcn_forward.1} parent=88 // pred_fallthru
              _
            // Predicated region
            $region94: #{gcn_forward.1} parent=88 // pred_check
              _
            $region95: #{gcn_forward.1} parent=88 // pred_check_branch
              %393 = sbr.rel target = $region97
            $region96: #{gcn_forward.1} parent=88 // pred_region
              %s395 = ssub.s32 256, 1
              loop: start=0, step=1, limit=1
              $region98: #{gcn_forward.1} parent=96 // loop_pre_header
                _
              $region99: #{gcn_forward.1} parent=96 // loop_header
                %s397 = sphi 0, %s401
                %p398 = scmp.ge.s32.totalorder %s397, 1
                %s402 = sphi %s382, %s382
                %s403 = sphi %s387, %s387
              $region100: #{gcn_forward.1} parent=96 // loop_header_branch
                %400 = sbr.rel (%p398) target = $region104
              $region101: #{gcn_forward.1} parent=96 // loop_body
                %v404 = vld [vmem:[%s402] sm:%s395]
                %405 = vst [vmem:[%s403] sm:%s395] %v404
                %v406 = vld [vmem:[%s402 + $0x8] sm:%s395]
                %407 = vst [vmem:[%s403 + $0x10] sm:%s395] %v406
              $region102: #{gcn_forward.1} parent=96 // loop_footer
                %s401 = sadd.s32 1, %s397
              $region103: #{gcn_forward.1} parent=96 // loop_footer_branch
                %396 = sbr.rel target = $region99
              $region104: #{gcn_forward.1} parent=96 // loop_exit
                _
            $region97: #{gcn_forward.1} parent=88 // pred_fallthru
              _
          $region89: #{gcn_forward.1} parent=84 // pred_fallthru
            _
          %424 = vnop
        $region85: #{gcn_forward.1} parent=76 // pred_fallthru
          _
      $region77: #{gcn_forward.1} parent=5 // pred_fallthru
        _
      %p425 = scmp.le.s32.totalorder 2, %s11
      // Predicated region
      $region120: #{gcn_forward.1} parent=5 // pred_check
        %p426 = pneg %p425
      $region121: #{gcn_forward.1} parent=5 // pred_check_branch
        %428 = sbr.rel (%p426) target = $region123
      $region122: #{gcn_forward.1} parent=5 // pred_region
        %s429 = ssub.s32 %s11, 2
        // Predicated region
        $region124: #{gcn_forward.1} parent=122 // pred_check
          %p430 = pneg %p150
        $region125: #{gcn_forward.1} parent=122 // pred_check_branch
          %432 = sbr.rel (%p430) target = $region127
        $region126: #{gcn_forward.1} parent=122 // pred_region
          %s433 = sand.u32 %s135, 1
          %s434 = sand.u32 %s135, 1
          %s435 = smul.addr %s434, 16
          %s436 = scalar_lea.vmem [#allocation3], %s435
        $region127: #{gcn_forward.1} parent=122 // pred_fallthru
          _
      $region123: #{gcn_forward.1} parent=5 // pred_fallthru
        _
    $region6: #{gcn_forward.1} parent=1 // loop_footer
      %s15 = sadd.s32 1, %s11
    $region7: #{gcn_forward.1} parent=1 // loop_footer_branch
      %10 = sbr.rel target = $region3
    $region8: #{gcn_forward.1} parent=1 // loop_exit
      _

</llo_original>
